<compile_context>
chip_gen: v7x
topology: tpu7x:2x2x1
jax: 0.10.0
libtpu: 0.0.40
codegen_flags: <defaults>
</compile_context>

<pallas_src>
import functools
import math

import jax
import jax.numpy as jnp
from jax import lax
from jax.experimental import pallas as pl
from jax.experimental.pallas import tpu as pltpu

EPS = 1e-5
NEG_INF = -1e9


def _tile(dim, target, mult):
    """Largest tile <= target that divides `dim` and is a multiple of `mult`.
    Falls back to the full extent if no such divisor exists."""
    if dim <= target:
        return dim
    t = (target // mult) * mult
    while t >= mult:
        if dim % t == 0:
            return t
        t -= mult
    # TODO(synk): pad + masked epilogue instead of whole-axis fallback.
    return dim


def _round_up(x, m):
    return (x + m - 1) // m * m


def _cparams(dims, est_bytes):
    """dimension_semantics + explicit scoped-VMEM limit (capped for v7x)."""
    limit = int(min(max(2 * est_bytes, 32 * 1024 * 1024), 60 * 1024 * 1024))
    return pltpu.CompilerParams(dimension_semantics=dims,
                                vmem_limit_bytes=limit)


# ----------------------- fused matmul (LN / GELU / residual) -----------------

def _matmul_kernel(*refs, has_residual, has_prologue, epilogue):
    it = iter(refs)
    x_ref = next(it)
    w_ref = next(it)
    r_ref = next(it) if has_residual else None
    pg_ref = next(it) if has_prologue else None
    pb_ref = next(it) if has_prologue else None
    eg_ref = next(it) if epilogue is not None else None
    eb_ref = next(it) if epilogue is not None else None
    o_ref = next(it)
    acc_ref = next(it)

    k_idx = pl.program_id(2)

    @pl.when(k_idx == 0)
    def _():
        if has_residual:
            # residual folded into the accumulator init (no epilogue add).
            acc_ref[...] = r_ref[...].astype(jnp.float32)
        else:
            acc_ref[...] = jnp.zeros_like(acc_ref)

    x = x_ref[...]
    if has_prologue:
        # Fused LayerNorm prologue (requires the full feature row, tk == K).
        xf = x.astype(jnp.float32)
        mu = jnp.mean(xf, axis=-1, keepdims=True)
        var = jnp.mean(jnp.square(xf - mu), axis=-1, keepdims=True)
        xf = (xf - mu) * lax.rsqrt(var + EPS)
        x = (xf * pg_ref[...] + pb_ref[...]).astype(jnp.bfloat16)
    else:
        x = x.astype(jnp.bfloat16)

    acc_ref[...] += jnp.dot(x, w_ref[...].astype(jnp.bfloat16),
                            preferred_element_type=jnp.float32)

    @pl.when(k_idx == pl.num_programs(2) - 1)
    def _():
        out = acc_ref[...]
        if epilogue is not None:
            if epilogue == "gelu_ln":
                # torch.nn.GELU default = exact (erf) formulation.
                out = jax.nn.gelu(out, approximate=False)
            mu = jnp.mean(out, axis=-1, keepdims=True)
            var = jnp.mean(jnp.square(out - mu), axis=-1, keepdims=True)
            out = (out - mu) * lax.rsqrt(var + EPS)
            out = out * eg_ref[...] + eb_ref[...]
        o_ref[...] = out.astype(o_ref.dtype)


def pallas_linear(x, w, *, residual=None, prologue_ln=None, epilogue=None,
                  epi_gamma=None, epi_beta=None, out_dtype=jnp.bfloat16,
                  tm=256, tn=256, tk=512):
    """x: (M, K) bf16/f32, w: (K, N) bf16 (pre-transposed) -> (M, N) out_dtype.
    Options: residual (M, N) folded into acc init; prologue_ln=(g, b) fused
    LayerNorm on x (forces tk=K); epilogue in {"ln","gelu_ln"} fused on the
    full output row (forces tn=N) with epi_gamma/epi_beta."""
    M, K = x.shape
    N = w.shape[1]
    tm = _tile(M, tm, 8)
    tn = N if epilogue is not None else _tile(N, tn, 128)
    tk = K if prologue_ln is not None else _tile(K, tk, 128)
    grid = (M // tm, N // tn, K // tk)

    in_specs = [pl.BlockSpec((tm, tk), lambda i, j, k: (i, k)),
                pl.BlockSpec((tk, tn), lambda i, j, k: (k, j))]
    args = [x, w]
    if residual is not None:
        in_specs.append(pl.BlockSpec((tm, tn), lambda i, j, k: (i, j)))
        args.append(residual)
    if prologue_ln is not None:
        pg, pb = prologue_ln
        in_specs.append(pl.BlockSpec((1, tk), lambda i, j, k: (0, k)))
        in_specs.append(pl.BlockSpec((1, tk), lambda i, j, k: (0, k)))
        args += [pg.reshape(1, K), pb.reshape(1, K)]
    if epilogue is not None:
        in_specs.append(pl.BlockSpec((1, tn), lambda i, j, k: (0, j)))
        in_specs.append(pl.BlockSpec((1, tn), lambda i, j, k: (0, j)))
        args += [epi_gamma.reshape(1, N), epi_beta.reshape(1, N)]

    est = (2 * (tm * tk * x.dtype.itemsize + tk * tn * w.dtype.itemsize
                + tm * tn * jnp.dtype(out_dtype).itemsize)
           + tm * tn * 4
           + (2 * tm * tn * residual.dtype.itemsize if residual is not None else 0))

    return pl.pallas_call(
        functools.partial(_matmul_kernel,
                          has_residual=residual is not None,
                          has_prologue=prologue_ln is not None,
                          epilogue=epilogue),
        grid=grid,
        in_specs=in_specs,
        out_specs=pl.BlockSpec((tm, tn), lambda i, j, k: (i, j)),
        out_shape=jax.ShapeDtypeStruct((M, N), out_dtype),
        scratch_shapes=[pltpu.VMEM((tm, tn), jnp.float32)],
        compiler_params=_cparams(("parallel", "parallel", "arbitrary"), est),
    )(*args)


# --------------------------- standalone layernorm ----------------------------

def _ln_kernel(x_ref, g_ref, b_ref, o_ref):
    x = x_ref[...].astype(jnp.float32)
    mu = jnp.mean(x, axis=-1, keepdims=True)
    var = jnp.mean(jnp.square(x - mu), axis=-1, keepdims=True)
    y = (x - mu) * lax.rsqrt(var + EPS)
    o_ref[...] = (y * g_ref[...] + b_ref[...]).astype(o_ref.dtype)


def pallas_layernorm(x, gamma, beta, *, out_dtype=jnp.bfloat16, tm=256):
    """Row-tiled LayerNorm over the last dim, bf16 output by default."""
    M, D = x.shape
    tm = _tile(M, tm, 8)
    est = 2 * tm * D * (x.dtype.itemsize + jnp.dtype(out_dtype).itemsize) + 8 * D * 4
    return pl.pallas_call(
        _ln_kernel,
        grid=(M // tm,),
        in_specs=[pl.BlockSpec((tm, D), lambda i: (i, 0)),
                  pl.BlockSpec((1, D), lambda i: (0, 0)),
                  pl.BlockSpec((1, D), lambda i: (0, 0))],
        out_specs=pl.BlockSpec((tm, D), lambda i: (i, 0)),
        out_shape=jax.ShapeDtypeStruct((M, D), out_dtype),
        compiler_params=_cparams(("parallel",), est),
    )(x, gamma.reshape(1, D), beta.reshape(1, D))


# ------------------------- flash attention (key-blocked) ---------------------

def _attn_kernel(q_ref, k_ref, v_ref, bias_ref, o_ref, m_scr, l_scr, acc_scr,
                 *, heads, scale):
    kv = pl.program_id(2)

    @pl.when(kv == 0)
    def _():
        m_scr[...] = jnp.full_like(m_scr, -jnp.inf)
        l_scr[...] = jnp.zeros_like(l_scr)
        acc_scr[...] = jnp.zeros_like(acc_scr)

    q = q_ref[0]                 # (tq, D)  bf16
    k = k_ref[0]                 # (tkv, D) bf16
    v = v_ref[0]                 # (tkv, D) bf16
    bias = bias_ref[0]           # (1, tkv) f32
    D = q.shape[-1]
    dh = D // heads

    # TODO(synk): pad head_dim to a multiple of 128 for full MXU utilization.
    for h in range(heads):       # static unrolled loop over heads
        sl = slice(h * dh, (h + 1) * dh)
        s = lax.dot_general(q[:, sl], k[:, sl], (((1,), (1,)), ((), ())),
                            preferred_element_type=jnp.float32)
        s = s * scale + bias                                   # (tq, tkv) f32
        m_prev = m_scr[:, h:h + 1]
        m_new = jnp.maximum(m_prev, jnp.max(s, axis=-1, keepdims=True))
        alpha = jnp.exp(m_prev - m_new)
        p = jnp.exp(s - m_new)
        l_scr[:, h:h + 1] = alpha * l_scr[:, h:h + 1] + jnp.sum(
            p, axis=-1, keepdims=True)
        acc_scr[:, sl] = alpha * acc_scr[:, sl] + jnp.dot(
            p.astype(jnp.bfloat16), v[:, sl], preferred_element_type=jnp.float32)
        m_scr[:, h:h + 1] = m_new

    @pl.when(kv == pl.num_programs(2) - 1)
    def _():
        outs = []
        for h in range(heads):
            sl = slice(h * dh, (h + 1) * dh)
            inv = pl.reciprocal(l_scr[:, h:h + 1], approx=True)
            outs.append(acc_scr[:, sl] * inv)
        # single lane-dense (tq, D) store.
        o_ref[0] = jnp.concatenate(outs, axis=-1).astype(o_ref.dtype)


def pallas_attention(q_src, k_src, v_src, q_col, k_col, v_col,
                     key_padding_mask, heads, dim, nq, nk, *,
                     tq=256, tkv=512, out_dtype=jnp.bfloat16):
    """Multi-head attention with online-softmax key blocking.
    q_src/k_src/v_src may be the same fused buffer ((B,N,3D) or (B,N,2D));
    q_col/k_col/v_col select the lane block (offset = col*dim) inside it.
    key_padding_mask: (B, nk) bool, True = ignore (torch semantics)."""
    B = q_src.shape[0]
    D = dim
    tq = _tile(nq, tq, 8)
    tkv = _tile(nk, tkv, 128)
    scale = 1.0 / math.sqrt(D // heads)
    bias = jnp.where(key_padding_mask, NEG_INF, 0.0).astype(jnp.float32)
    bias = bias.reshape(B, 1, nk)

    def q_map(c):
        return lambda b, i, kv: (b, i, c)

    def kv_map(c):
        return lambda b, i, kv: (b, kv, c)

    est = (2 * (tq * D * 2 + 2 * tkv * D * 2 + tkv * 4 + tq * D * 2)
           + (2 * tq * heads + tq * D) * 4)

    return pl.pallas_call(
        functools.partial(_attn_kernel, heads=heads, scale=scale),
        grid=(B, nq // tq, nk // tkv),
        in_specs=[
            pl.BlockSpec((1, tq, D), q_map(q_col)),
            pl.BlockSpec((1, tkv, D), kv_map(k_col)),
            pl.BlockSpec((1, tkv, D), kv_map(v_col)),
            pl.BlockSpec((1, 1, tkv), lambda b, i, kv: (b, 0, kv)),
        ],
        out_specs=pl.BlockSpec((1, tq, D), lambda b, i, kv: (b, i, 0)),
        out_shape=jax.ShapeDtypeStruct((B, nq, D), out_dtype),
        scratch_shapes=[pltpu.VMEM((tq, heads), jnp.float32),
                        pltpu.VMEM((tq, heads), jnp.float32),
                        pltpu.VMEM((tq, D), jnp.float32)],
        compiler_params=_cparams(("parallel", "parallel", "arbitrary"), est),
    )(q_src, k_src, v_src, bias)


# --------------------------- model (JAX glue) --------------------------------

def multihead_attention(x_q, x_kv, p, key_padding_mask, heads, residual,
                        prologue_ln=None):
    """nn.MultiheadAttention(bias=False, batch_first=True), eval mode.
    Self-attn: one fused QKV matmul; cross-attn: Q (with optional fused LN
    prologue) + fused KV matmul. Attention reads fused buffers in place.
    Residual add is fused into the output projection."""
    B, Nq, D = x_q.shape
    fused_ok = (D % 128 == 0)   # lane-offset BlockSpecs need 128-aligned D.
    if "w_qkv" in p:                                       # self-attention
        qkv = pallas_linear(x_q.reshape(B * Nq, D), p["w_qkv"],
                            prologue_ln=prologue_ln).reshape(B, Nq, 3 * D)
        if fused_ok:
            o = pallas_attention(qkv, qkv, qkv, 0, 1, 2,
                                 key_padding_mask, heads, D, Nq, Nq)
        else:
            q, k, v = qkv[..., :D], qkv[..., D:2 * D], qkv[..., 2 * D:]
            o = pallas_attention(q, k, v, 0, 0, 0,
                                 key_padding_mask, heads, D, Nq, Nq)
    else:                                                  # cross-attention
        Nk = x_kv.shape[1]
        q = pallas_linear(x_q.reshape(B * Nq, D), p["w_q"],
                          prologue_ln=prologue_ln).reshape(B, Nq, D)
        kv = pallas_linear(x_kv.reshape(B * Nk, D), p["w_kv"]).reshape(B, Nk, 2 * D)
        if fused_ok:
            o = pallas_attention(q, kv, kv, 0, 0, 1,
                                 key_padding_mask, heads, D, Nq, Nk)
        else:
            k, v = kv[..., :D], kv[..., D:]
            o = pallas_attention(q, k, v, 0, 0, 0,
                                 key_padding_mask, heads, D, Nq, Nk)
    return pallas_linear(o.reshape(B * Nq, D), p["w_out"],
                         residual=residual.reshape(B * Nq, D)).reshape(B, Nq, D)


def feed_forward_block(x, p, norm_out_g, zeros_d):
    """norm_out(Linear2(LN(GELU(Linear1(x)))) + x); dropout = identity (eval).
    Two fused kernels: w1 with GELU+LN epilogue, w2 with residual + LN(out)."""
    B, N, D = x.shape
    x2d = x.reshape(B * N, D)
    h = pallas_linear(x2d, p["w1"], epilogue="gelu_ln",
                      epi_gamma=p["ln_g"], epi_beta=p["ln_b"])     # (M, inner) bf16
    y = pallas_linear(h, p["w2"], residual=x2d, epilogue="ln",
                      epi_gamma=norm_out_g, epi_beta=zeros_d)      # (M, D) bf16
    return y.reshape(B, N, D)


def transformer_block(x, p, mask, context, context_mask, heads):
    B, N, D = x.shape
    zeros_d = jnp.zeros((D,), jnp.float32)
    for layer in p["layers"]:
        # x = norm_sa(x); x = attn(x, x, x) + x   (residual is the *normed* x,
        # matching the source which reassigns x = norm_sa(x) before attn).
        xn = pallas_layernorm(x.reshape(B * N, D), p["norm_sa_g"],
                              zeros_d).reshape(B, N, D)
        x = multihead_attention(xn, xn, layer["attn"], mask, heads, residual=xn)
        # x = cross_attn(norm_cross(x), context) + x   (residual = pre-norm x);
        # norm_cross is fused as an LN prologue of the Q projection.
        x = multihead_attention(x, context, layer["cross"], context_mask, heads,
                                residual=x,
                                prologue_ln=(p["norm_cross_g"], zeros_d))
        # x = norm_out(ff(x) + x)
        x = feed_forward_block(x, layer["ff"], p["norm_out_g"], zeros_d)
    return x


def sinusoidal_pos_emb(n, d):
    pos = jnp.arange(n, dtype=jnp.float32)[:, None]
    i = jnp.arange(d // 2, dtype=jnp.float32)[None, :]
    freqs = pos / jnp.power(10000.0, 2.0 * i / d)
    pe = jnp.zeros((n, d), jnp.float32)
    pe = pe.at[:, 0::2].set(jnp.sin(freqs))
    pe = pe.at[:, 1::2].set(jnp.cos(freqs))
    return pe


def transformer_forward(params, x_tokens, mask=None,
                        context_embed=None, context_mask=None):
    B, N = x_tokens.shape
    D = params["dim"]
    if mask is None:
        # torch key_padding_mask: True = ignore.  The source writes
        # `mask = x != mask_id`, which would ignore every real token; use the
        # evidently intended polarity instead.
        # TODO(synk): flip back if bit-faithfulness to the source expression is required.
        mask = x_tokens == params["mask_id"]
    # TODO(synk): prepare_inputs' `context_mask = context_embed != mask_id`
    # compares a float embedding to an int id (shape-inconsistent in the
    # original); require an explicit context_mask instead.
    assert context_embed is not None and context_mask is not None

    pos = sinusoidal_pos_emb(N, D)                            # (N, D)
    h = params["token_emb"][x_tokens] + pos[None]             # (B, N, D) f32
    h = pallas_layernorm(h.reshape(B * N, D), params["post_emb_g"],
                         params["post_emb_b"]).reshape(B, N, D)     # bf16
    context = context_embed.astype(jnp.bfloat16)
    embed = transformer_block(h, params["blocks"], mask,
                              context, context_mask, params["heads"])
    logits = pallas_linear(embed.reshape(B * N, D), params["to_logits"],
                           out_dtype=jnp.float32)             # (M, padded_out)
    logits = logits[:, :params["dim_out"]]
    return logits.reshape(B, N, params["dim_out"])


# --------------------------- parameter init ----------------------------------

def init_params(key, *, dim, heads, depth, num_tokens, add_mask_id,
                ff_mult, dim_out=None):
    inner = dim * ff_mult
    vocab = num_tokens + int(add_mask_id)
    dim_out = dim_out if dim_out is not None else num_tokens
    keys = iter(jax.random.split(key, 4 + 8 * depth))

    def w(shape):
        # weights stored pre-transposed (K, N) and in bf16 for the MXU.
        return (0.02 * jax.random.normal(next(keys), shape, jnp.float32)
                ).astype(jnp.bfloat16)

    layers = []
    for _ in range(depth):
        layers.append({
            "attn": {"w_qkv": w((dim, 3 * dim)), "w_out": w((dim, dim))},
            "cross": {"w_q": w((dim, dim)), "w_kv": w((dim, 2 * dim)),
                      "w_out": w((dim, dim))},
            "ff": {"w1": w((dim, inner)),
                   "ln_g": jnp.ones((inner,), jnp.float32),
                   "ln_b": jnp.zeros((inner,), jnp.float32),
                   "w2": w((inner, dim))},
        })

    # Pad the vocab projection to a multiple of 128 for lane-dense stores.
    dim_out_padded = _round_up(dim_out, 128)
    w_logits = 0.02 * jax.random.normal(next(keys), (dim, dim_out), jnp.float32)
    w_logits = jnp.pad(w_logits, ((0, 0), (0, dim_out_padded - dim_out)))
    return {
        "dim": dim,
        "heads": heads,
        "dim_out": dim_out,
        "mask_id": num_tokens if add_mask_id else None,
        "token_emb": 0.02 * jax.random.normal(next(keys), (vocab, dim),
                                              jnp.float32),
        "post_emb_g": jnp.ones((dim,), jnp.float32),
        "post_emb_b": jnp.zeros((dim,), jnp.float32),
        "to_logits": w_logits.astype(jnp.bfloat16),
        "blocks": {
            "layers": layers,
            "norm_sa_g": jnp.ones((dim,), jnp.float32),
            "norm_cross_g": jnp.ones((dim,), jnp.float32),
            "norm_out_g": jnp.ones((dim,), jnp.float32),
        },
    }


# ------------------------------- main -----------------------------------------

if __name__ == "__main__":
    DIM, HEADS, DEPTH = 128, 4, 1
    NUM_TOKENS, SEQ, CTX = 16, 8, 8
    B = 2

    key = jax.random.PRNGKey(0)
    kp, kx, kc = jax.random.split(key, 3)

    params = init_params(kp, dim=DIM, heads=HEADS, depth=DEPTH,
                         num_tokens=NUM_TOKENS, add_mask_id=True, ff_mult=4)

    x = jax.random.randint(kx, (B, SEQ), 0, NUM_TOKENS, dtype=jnp.int32)
    context = jax.random.normal(kc, (B, CTX, DIM), jnp.float32)
    # torch key_padding_mask semantics: True = ignore that key position.
    mask = jnp.zeros((B, SEQ), bool).at[:, -2:].set(True)
    context_mask = jnp.zeros((B, CTX), bool).at[:, -1:].set(True)

    logits = transformer_forward(params, x, mask=mask,
                                 context_embed=context,
                                 context_mask=context_mask)
    jax.block_until_ready(logits)
    assert logits.shape == (B, SEQ, NUM_TOKENS)
    assert bool(jnp.all(jnp.isfinite(logits)))
    print("KERNEL_OK")
</pallas_src>

<mosaic_0001>
module attributes {stable_mosaic.version = 11 : i64} {
  func.func @_ln_kernel(%arg0: i32, %arg1: memref<16x128xf32, #tpu.memory_space<vmem>>, %arg2: memref<1x128xf32, #tpu.memory_space<vmem>>, %arg3: memref<1x128xf32, #tpu.memory_space<vmem>>, %arg4: memref<16x128xbf16, #tpu.memory_space<vmem>>) attributes {dimension_semantics = [#tpu.dimension_semantics<parallel>], iteration_bounds = array<i64: 1>, scalar_prefetch = 0 : i64, scratch_operands = 0 : i64, tpu.core_type = #tpu.core_type<tc>, window_params = [{transform_indices = @transform_0, window_bounds = array<i64: 16, 128>}, {pipeline_mode = #tpu.pipeline_mode<synchronous>, transform_indices = @transform_1, window_bounds = array<i64: 1, 128>}, {pipeline_mode = #tpu.pipeline_mode<synchronous>, transform_indices = @transform_2, window_bounds = array<i64: 1, 128>}, {transform_indices = @transform_3, window_bounds = array<i64: 16, 128>}]} {
    %c0 = arith.constant 0 : index
    %c0_0 = arith.constant 0 : index
    %0 = vector.load %arg1[%c0, %c0_0] : memref<16x128xf32, #tpu.memory_space<vmem>>, vector<16x128xf32>
    %cst = arith.constant dense<0.000000e+00> : vector<16xf32>
    %1 = vector.multi_reduction <add>, %0, %cst [1] : vector<16x128xf32> to vector<16xf32>
    %2 = vector.shape_cast %1 : vector<16xf32> to vector<16x1xf32>
    %cst_1 = arith.constant 1.280000e+02 : f32
    %3 = vector.broadcast %cst_1 : f32 to vector<16x1xf32>
    %4 = arith.divf %2, %3 : vector<16x1xf32>
    %5 = vector.broadcast %4 : vector<16x1xf32> to vector<16x128xf32>
    %6 = arith.subf %0, %5 : vector<16x128xf32>
    %7 = arith.mulf %6, %6 : vector<16x128xf32>
    %cst_2 = arith.constant dense<0.000000e+00> : vector<16xf32>
    %8 = vector.multi_reduction <add>, %7, %cst_2 [1] : vector<16x128xf32> to vector<16xf32>
    %9 = vector.shape_cast %8 : vector<16xf32> to vector<16x1xf32>
    %cst_3 = arith.constant 1.280000e+02 : f32
    %10 = vector.broadcast %cst_3 : f32 to vector<16x1xf32>
    %11 = arith.divf %9, %10 : vector<16x1xf32>
    %12 = vector.broadcast %4 : vector<16x1xf32> to vector<16x128xf32>
    %13 = arith.subf %0, %12 : vector<16x128xf32>
    %cst_4 = arith.constant 9.99999974E-6 : f32
    %14 = vector.broadcast %cst_4 : f32 to vector<16x1xf32>
    %15 = arith.addf %11, %14 : vector<16x1xf32>
    %16 = math.rsqrt %15 : vector<16x1xf32>
    %17 = vector.broadcast %16 : vector<16x1xf32> to vector<16x128xf32>
    %18 = arith.mulf %13, %17 : vector<16x128xf32>
    %c0_5 = arith.constant 0 : index
    %c0_6 = arith.constant 0 : index
    %19 = vector.load %arg2[%c0_5, %c0_6] : memref<1x128xf32, #tpu.memory_space<vmem>>, vector<1x128xf32>
    %20 = vector.broadcast %19 : vector<1x128xf32> to vector<16x128xf32>
    %21 = arith.mulf %18, %20 : vector<16x128xf32>
    %c0_7 = arith.constant 0 : index
    %c0_8 = arith.constant 0 : index
    %22 = vector.load %arg3[%c0_7, %c0_8] : memref<1x128xf32, #tpu.memory_space<vmem>>, vector<1x128xf32>
    %23 = vector.broadcast %22 : vector<1x128xf32> to vector<16x128xf32>
    %24 = arith.addf %21, %23 : vector<16x128xf32>
    %25 = arith.truncf %24 : vector<16x128xf32> to vector<16x128xbf16>
    %c0_9 = arith.constant 0 : index
    %c0_10 = arith.constant 0 : index
    %26 = vector.load %arg4[%c0_9, %c0_10] : memref<16x128xbf16, #tpu.memory_space<vmem>>, vector<16x128xbf16>
    tpu.vector_store %arg4[%c0_9, %c0_10], %25 {strides = array<i32>} : memref<16x128xbf16, #tpu.memory_space<vmem>>, vector<16x128xbf16>,
    return
  }
  func.func @transform_0(%arg0: i32) -> (i32, i32) {
    %c0_i32 = arith.constant 0 : i32
    %c0_i32_0 = arith.constant 0 : i32
    return %arg0, %c0_i32 : i32, i32
  }
  func.func @transform_1(%arg0: i32) -> (i32, i32) {
    %c0_i32 = arith.constant 0 : i32
    %c0_i32_0 = arith.constant 0 : i32
    %c0_i32_1 = arith.constant 0 : i32
    return %c0_i32, %c0_i32_0 : i32, i32
  }
  func.func @transform_2(%arg0: i32) -> (i32, i32) {
    %c0_i32 = arith.constant 0 : i32
    %c0_i32_0 = arith.constant 0 : i32
    %c0_i32_1 = arith.constant 0 : i32
    return %c0_i32, %c0_i32_0 : i32, i32
  }
  func.func @transform_3(%arg0: i32) -> (i32, i32) {
    %c0_i32 = arith.constant 0 : i32
    %c0_i32_0 = arith.constant 0 : i32
    return %arg0, %c0_i32 : i32, i32
  }
}

</mosaic_0001>

<llo_original>
// kernel: tpu_custom_call.1
$region0: #{tpu_custom_call.1}
  #allocation0 [shape = 'u32[]', space=smem, size = 0x4, offset = 0x4, fixed_abs, tag = 'smem constant byte address 0x4 - core index']
  #allocation1 [shape = 'u32[144,128]{1,0:T(1,128)}', space=vmem, size = 0x12000, scoped, tag = 'internal scratch']
  %s0 = inlined_call_operand.hbm [shape: f32[16,128], index: 0, kind: input, shape index: {}]
  %s1 = inlined_call_operand.vmem [shape: f32[1,128], index: 1, kind: input, shape index: {}]
  %s2 = inlined_call_operand.vmem [shape: f32[1,128], index: 2, kind: input, shape index: {}]
  %s3 = inlined_call_operand.hbm [shape: bf16[16,128], index: 3, kind: output, shape index: {}]
  %s4 = sld [smem:[#allocation0]]
  $region26: #{tpu_custom_call.1} parent=0
    _
  %s6 = ssub.s32 1, %s4
  %s7 = scalar_select 0, %s6, %s4
  $region1: #{tpu_custom_call.1} parent=0
    #allocation2 [shape = 'u8[8192]{0}', space=vmem, size = 0x2000, scoped, tag = 'input window, operand 0, single buffered']
    #allocation3 [shape = 's32[1]{0}', space=sflag, size = 0x4, scoped, tag = 'scoped memory for tpu_custom_call.1']
    #allocation4 [shape = 's32[1]{0}', space=sflag, size = 0x4, scoped, tag = 'scoped memory for tpu_custom_call.1']
    #allocation5 [shape = 'u8[4096]{0}', space=vmem, size = 0x1000, scoped, tag = 'output window, operand 0, single buffered']
    %8 = vsyncpa [#allocation3], 0
    %9 = vsyncpa [#allocation4], 0
    // Predicated region
    $region2: #{tpu_custom_call.1} parent=1 // pred_check
      _
    $region3: #{tpu_custom_call.1} parent=1 // pred_check_branch
      %11 = sbr.rel (0) target = $region5
    $region4: #{tpu_custom_call.1} parent=1 // pred_region
      %s13 = ssub.s32 256, 256
      %14 = vsyncadd [#allocation3], %s13
      %s15 = sshll.u32 [#allocation2], 4
      %s16 = int_to_ptr.vmem [resolvable:$true] %s15
      %21 = dma.hbm_to_vmem [thread:$0]  %s0, 256, %s16, [#allocation3], 128, 128, 8
    $region5: #{tpu_custom_call.1} parent=1 // pred_fallthru
      _
    // Predicated region
    $region6: #{tpu_custom_call.1} parent=1 // pred_check
      _
    $region7: #{tpu_custom_call.1} parent=1 // pred_check_branch
      %23 = sbr.rel (0) target = $region9
    $region8: #{tpu_custom_call.1} parent=1 // pred_region
      _
    $region9: #{tpu_custom_call.1} parent=1 // pred_fallthru
      _
    // Predicated region
    $region10: #{tpu_custom_call.1} parent=1 // pred_check
      _
    $region11: #{tpu_custom_call.1} parent=1 // pred_check_branch
      %25 = sbr.rel (0) target = $region13
    $region12: #{tpu_custom_call.1} parent=1 // pred_region
      _
    $region13: #{tpu_custom_call.1} parent=1 // pred_fallthru
      _
    // Predicated region
    $region14: #{tpu_custom_call.1} parent=1 // pred_check
      _
    $region15: #{tpu_custom_call.1} parent=1 // pred_check_branch
      %27 = sbr.rel (0) target = $region17
    $region16: #{tpu_custom_call.1} parent=1 // pred_region
      %28 = dma.done [#allocation3], 256
    $region17: #{tpu_custom_call.1} parent=1 // pred_fallthru
      _
    %v29 = vld [vmem:[#allocation2] sm:$0xff]
    %v30 = vld [vmem:[#allocation2 + $0x8] sm:$0xff]
    %31 = vadd.xlane.f32.xlu0 %v29
    %v32 = vpop.xlane.xlu0 %31
    %33 = vadd.xlane.f32.xlu0 %v30
    %v34 = vpop.xlane.xlu0 %33
    %v35 = vrcp.pop 128.0
    %v36 = vmul.f32 %v32, %v35
    %v37 = vmul.f32 %v34, %v35
    %v38 = vsub.f32 %v29, %v36
    %v39 = vsub.f32 %v30, %v37
    %v40 = vmul.f32 %v38, %v38
    %v41 = vmul.f32 %v39, %v39
    %42 = vadd.xlane.f32.xlu0 %v40
    %v43 = vpop.xlane.xlu0 %42
    %44 = vadd.xlane.f32.xlu0 %v41
    %v45 = vpop.xlane.xlu0 %44
    %v46 = vmul.f32 %v43, %v35
    %v47 = vmul.f32 %v45, %v35
    %v48 = vadd.f32 %v46, 1e-05
    %v49 = vadd.f32 %v47, 1e-05
    %v50 = vrsqrt.pop %v48
    %v51 = vrsqrt.pop %v49
    %v52 = vmul.f32 %v38, %v50
    %v53 = vmul.f32 %v39, %v51
    %v54 = vld [vmem:[%s1] sm:$0x1]
    %v56 = vlaneseq
    %v57 = vshrl.u32 %v56, 7
    %v58 = vsub.s32 0, %v57
    %v59 = vrot.slane %v54, %v58
    %v61 = vmul.f32 %v52, %v59
    %v62 = vmul.f32 %v53, %v59
    %v63 = vld [vmem:[%s2] sm:$0x1]
    %v65 = vlaneseq
    %v66 = vshrl.u32 %v65, 7
    %v67 = vsub.s32 0, %v66
    %v68 = vrot.slane %v63, %v67
    %v70 = vadd.f32 %v61, %v68
    %v71 = vadd.f32 %v62, %v68
    %v72 = vpack.c.bf16 %v71, %v70
    %v74 = vunpack.c.l.b16 %v72
    %v75 = vunpack.c.h.b16 %v72
    %v76 = vpack.c.b16 %v74, %v74
    %v77 = vpack.c.b16 %v75, %v75
    %80 = vst [vmem:[#allocation5] sm:$0xf] %v76
    %81 = vst [vmem:[#allocation5 + $0x4] sm:$0xf] %v77
    // Predicated region
    $region18: #{tpu_custom_call.1} parent=1 // pred_check
      _
    $region19: #{tpu_custom_call.1} parent=1 // pred_check_branch
      %83 = sbr.rel (0) target = $region21
    $region20: #{tpu_custom_call.1} parent=1 // pred_region
      %s85 = ssub.s32 128, 128
      %86 = vsyncadd [#allocation4], %s85
      %s87 = sshll.u32 [#allocation5], 4
      %s88 = int_to_ptr.vmem [resolvable:$true] %s87
      %93 = dma.vmem_to_hbm [thread:$0]  %s88, 128, %s3, [#allocation4], 64, 64, 4
    $region21: #{tpu_custom_call.1} parent=1 // pred_fallthru
      _
    // Predicated region
    $region22: #{tpu_custom_call.1} parent=1 // pred_check
      _
    $region23: #{tpu_custom_call.1} parent=1 // pred_check_branch
      %95 = sbr.rel (0) target = $region25
    $region24: #{tpu_custom_call.1} parent=1 // pred_region
      %96 = dma.done [#allocation4], 128
    $region25: #{tpu_custom_call.1} parent=1 // pred_fallthru
      _
    %97 = vsyncpa [#allocation3], 1
    %98 = vsyncpa [#allocation4], 1

</llo_original>
